<compile_context>
chip_gen: v7x
topology: tpu7x:2x2x1
jax: 0.10.0
libtpu: 0.0.40
codegen_flags: <defaults>
</compile_context>

<pallas_src>
import functools
import math

import jax
import jax.numpy as jnp
from jax.experimental import pallas as pl
from jax.experimental.pallas import tpu as pltpu


def _round_up(x: int, m: int) -> int:
    return (x + m - 1) // m * m


def _choose_tokens_per_block(num_tokens: int, max_block: int) -> int:
    """Largest block (multiple of 16) that still leaves >=2 grid blocks if possible."""
    t = max_block
    while t > 16 and _round_up(num_tokens, t) // t < 2:
        t //= 2
    return max(16, min(t, _round_up(num_tokens, 16)))


def _vmem_capacity_bytes() -> int:
    try:
        return int(pltpu.get_tpu_info().vmem_capacity_bytes)
    except Exception:
        return 64 * 1024 * 1024  # conservative (v7x-sized) fallback


# ---------------------------------------------------------------------------
# Fast path: table resident in VMEM, one-hot gather on the (otherwise idle) MXU.
# ---------------------------------------------------------------------------
def _embed_onehot_kernel(ids_ref, table_ref, out_ref, *, scale):
    ids = ids_ref[...]                                    # (T, 1) int32
    tokens = ids.shape[0]
    vocab = table_ref.shape[0]
    vocab_iota = jax.lax.broadcasted_iota(jnp.int32, (tokens, vocab), 1)
    one_hot = (vocab_iota == ids).astype(table_ref.dtype)  # 0/1 -> exact matmul
    gathered = jnp.dot(one_hot, table_ref[...],
                       preferred_element_type=jnp.float32)  # (T, D) f32
    out_ref[...] = (gathered * scale).astype(out_ref.dtype)


def _call_resident(ids_pad, emb_table, *, tokens_per_block, scale, out_dtype,
                   vmem_limit_bytes, table_pipeline_mode):
    padded = ids_pad.shape[0]
    vocab_size, d_model = emb_table.shape
    itemsize = emb_table.dtype.itemsize

    if table_pipeline_mode is None:
        table_spec = pl.BlockSpec((vocab_size, d_model), lambda i: (0, 0))
    else:
        # Constant index_map -> a single resident buffer is enough.
        table_spec = pl.BlockSpec((vocab_size, d_model), lambda i: (0, 0),
                                  pipeline_mode=table_pipeline_mode)

    flops = 2 * padded * vocab_size * d_model
    bytes_accessed = (vocab_size * d_model * itemsize + padded * 4
                      + padded * d_model * itemsize)

    return pl.pallas_call(
        functools.partial(_embed_onehot_kernel, scale=scale),
        out_shape=jax.ShapeDtypeStruct((padded, d_model), out_dtype),
        grid_spec=pltpu.PrefetchScalarGridSpec(
            num_scalar_prefetch=0,
            grid=(padded // tokens_per_block,),
            in_specs=[
                pl.BlockSpec((tokens_per_block, 1), lambda i: (i, 0)),
                table_spec,
            ],
            out_specs=pl.BlockSpec((tokens_per_block, d_model),
                                   lambda i: (i, 0)),
        ),
        compiler_params=pltpu.CompilerParams(
            dimension_semantics=("parallel",),
            vmem_limit_bytes=vmem_limit_bytes,
        ),
        cost_estimate=pl.CostEstimate(flops=flops, transcendentals=0,
                                      bytes_accessed=bytes_accessed),
    )(ids_pad, emb_table)


# ---------------------------------------------------------------------------
# Large-table path: table stays in HBM, manual double-buffered row-gather DMA.
# ---------------------------------------------------------------------------
def _embed_dma_gather_kernel(ids_ref, table_hbm, out_ref, row_buf, sems, *,
                             scale, tokens_per_block):
    i = pl.program_id(0)
    n_blocks = pl.num_programs(0)
    slot = jax.lax.rem(i, 2)

    def issue_block(block_idx, to_slot):
        base = block_idx * tokens_per_block

        @pl.loop(0, tokens_per_block)
        def _issue(t):
            row = ids_ref[base + t]                      # scalar read from SMEM
            pltpu.make_async_copy(table_hbm.at[row],
                                  row_buf.at[to_slot, t],
                                  sems.at[to_slot, t]).start()

    # Prime slot 0 with the very first block (grid axis is "arbitrary", so
    # program_id(0) == 0 really is the first step executed).
    @pl.when(i == 0)
    def _():
        issue_block(0, 0)

    # Issue the *next* block's row DMAs before any .wait() on the current slot:
    # scalar id reads stay ahead of the waits (SMEM sst->sld forwarding) and the
    # next block's HBM traffic overlaps this block's wait + scale + store.
    @pl.when(i + 1 < n_blocks)
    def _():
        issue_block(i + 1, 1 - slot)

    @pl.loop(0, tokens_per_block)
    def _wait(t):
        # The wait only needs a matching dst/semaphore; .at[0] has the same
        # (d_model,) shape as every gathered row.
        pltpu.make_async_copy(table_hbm.at[0], row_buf.at[slot, t],
                              sems.at[slot, t]).wait()

    # Scale in f32 (native VPU path on all generations), cast once on store.
    out_ref[...] = (row_buf[slot].astype(jnp.float32) * scale).astype(out_ref.dtype)


def _call_dma_gather(ids_pad, emb_table, *, tokens_per_block, scale, out_dtype,
                     vmem_limit_bytes):
    padded = ids_pad.shape[0]
    vocab_size, d_model = emb_table.shape
    itemsize = emb_table.dtype.itemsize
    bytes_accessed = 2 * padded * d_model * itemsize + padded * 4

    return pl.pallas_call(
        functools.partial(_embed_dma_gather_kernel, scale=scale,
                          tokens_per_block=tokens_per_block),
        out_shape=jax.ShapeDtypeStruct((padded, d_model), out_dtype),
        grid_spec=pltpu.PrefetchScalarGridSpec(
            num_scalar_prefetch=1,                      # ids -> SMEM
            grid=(padded // tokens_per_block,),
            in_specs=[pl.BlockSpec(memory_space=pl.ANY)],   # table stays in HBM
            out_specs=pl.BlockSpec((tokens_per_block, d_model),
                                   lambda i, ids: (i, 0)),
            scratch_shapes=[
                pltpu.VMEM((2, tokens_per_block, d_model), emb_table.dtype),
                pltpu.SemaphoreType.DMA((2, tokens_per_block)),
            ],
        ),
        # "arbitrary": the prime-at-step-0 double-buffer carry requires this
        # axis to run sequentially on one core.
        # TODO(synk): per-core priming (pl.core_map) to use both v7x TCs here.
        compiler_params=pltpu.CompilerParams(
            dimension_semantics=("arbitrary",),
            vmem_limit_bytes=vmem_limit_bytes,
        ),
        cost_estimate=pl.CostEstimate(flops=padded * d_model,
                                      transcendentals=0,
                                      bytes_accessed=bytes_accessed),
    )(ids_pad, emb_table)


# ---------------------------------------------------------------------------
# Wrapper: forward(x) = emb_table[x] * sqrt(d_model)
# ---------------------------------------------------------------------------
def input_embeddings(ids, emb_table, *, max_resident_vocab=4096):
    """ids: int array of any shape; emb_table: (vocab_size, d_model)."""
    vocab_size, d_model = emb_table.shape
    out_dtype = emb_table.dtype
    itemsize = emb_table.dtype.itemsize
    scale = float(math.sqrt(d_model))

    orig_shape = ids.shape
    # nn.Embedding raises on out-of-range ids; we clamp so the gather is safe.
    flat_ids = jnp.clip(ids.reshape(-1).astype(jnp.int32), 0, vocab_size - 1)
    num_tokens = flat_ids.shape[0]
    if num_tokens == 0:
        return jnp.zeros(orig_shape + (d_model,), dtype=out_dtype)

    vmem_cap = _vmem_capacity_bytes()
    table_bytes = vocab_size * d_model * itemsize
    # ~3/8 of VMEM for the resident table: ~24 MiB on v7x, ~48 MiB on v5e/v6e.
    resident_table_budget = vmem_cap * 3 // 8
    # One-hot costs O(vocab) VPU work per token; only worth it when vocab is a
    # few thousand at most and not wildly larger than d_model.
    use_resident = (table_bytes <= resident_table_budget
                    and vocab_size <= max_resident_vocab
                    and vocab_size <= 32 * d_model)

    if use_resident:
        tokens_per_block = _choose_tokens_per_block(num_tokens, 256)
        padded = _round_up(num_tokens, tokens_per_block)
        ids_pad = jnp.pad(flat_ids, (0, padded - num_tokens)).reshape(padded, 1)

        # Worst-case VMEM footprint (assume double-buffered table in case the
        # Buffered(1) spec is unavailable): table x2 + out blocks x2 + id
        # blocks x2 + iota/one-hot/f32-result temporaries.
        needed = (2 * table_bytes
                  + 2 * tokens_per_block * d_model * itemsize
                  + 2 * tokens_per_block * 4
                  + tokens_per_block * vocab_size * (4 + itemsize)
                  + tokens_per_block * d_model * 4)
        vmem_limit = int(min(max(needed + (8 << 20), 32 << 20),
                             vmem_cap - (4 << 20)))
        kwargs = dict(tokens_per_block=tokens_per_block, scale=scale,
                      out_dtype=out_dtype, vmem_limit_bytes=vmem_limit)
        try:
            out_flat = _call_resident(ids_pad, emb_table,
                                      table_pipeline_mode=pl.Buffered(1),
                                      **kwargs)
        except Exception:
            # Older Pallas without pipeline_mode: fall back to default buffering.
            out_flat = _call_resident(ids_pad, emb_table,
                                      table_pipeline_mode=None, **kwargs)
    else:
        tokens_per_block = _choose_tokens_per_block(num_tokens, 128)
        padded = _round_up(num_tokens, tokens_per_block)
        ids_pad = jnp.pad(flat_ids, (0, padded - num_tokens))

        needed = (2 * 2 * tokens_per_block * d_model * itemsize  # row_buf + out
                  + tokens_per_block * d_model * 4)
        vmem_limit = int(min(max(needed + (8 << 20), 32 << 20),
                             vmem_cap - (4 << 20)))
        out_flat = _call_dma_gather(ids_pad, emb_table,
                                    tokens_per_block=tokens_per_block,
                                    scale=scale, out_dtype=out_dtype,
                                    vmem_limit_bytes=vmem_limit)

    # Padding rows gathered row 0; sliced off here.
    return out_flat[:num_tokens].reshape(orig_shape + (d_model,))


if __name__ == "__main__":
    vocab_size = 64
    d_model = 128
    batch, seq = 2, 8

    key = jax.random.PRNGKey(0)
    k_emb, k_ids = jax.random.split(key)

    # nn.Embedding default init: N(0, 1)
    emb_table = jax.random.normal(k_emb, (vocab_size, d_model), dtype=jnp.float32)
    x = jax.random.randint(k_ids, (batch, seq), 0, vocab_size, dtype=jnp.int32)

    ref = jnp.take(emb_table, x, axis=0) * math.sqrt(d_model)

    # Resident (one-hot MXU gather) path.
    out = jax.block_until_ready(input_embeddings(x, emb_table))
    assert out.shape == (batch, seq, d_model)
    assert jnp.allclose(out, ref, atol=1e-5, rtol=1e-5)

    # Large-table (manual double-buffered DMA row-gather) path, forced.
    out_dma = jax.block_until_ready(
        input_embeddings(x, emb_table, max_resident_vocab=0))
    assert out_dma.shape == (batch, seq, d_model)
    assert jnp.allclose(out_dma, ref, atol=1e-5, rtol=1e-5)

    print("KERNEL_OK")
</pallas_src>

<mosaic_0001>
module attributes {stable_mosaic.version = 11 : i64} {
  func.func @_embed_onehot_kernel(%arg0: i32, %arg1: memref<16x1xi32, #tpu.memory_space<vmem>>, %arg2: memref<64x128xf32, #tpu.memory_space<vmem>>, %arg3: memref<16x128xf32, #tpu.memory_space<vmem>>) attributes {dimension_semantics = [#tpu.dimension_semantics<parallel>], iteration_bounds = array<i64: 1>, scalar_prefetch = 0 : i64, scratch_operands = 0 : i64, tpu.core_type = #tpu.core_type<tc>, window_params = [{transform_indices = @transform_0, window_bounds = array<i64: 16, 1>}, {pipeline_mode = #tpu.pipeline_mode<synchronous>, transform_indices = @transform_1, window_bounds = array<i64: 64, 128>}, {transform_indices = @transform_2, window_bounds = array<i64: 16, 128>}]} {
    %c0 = arith.constant 0 : index
    %c0_0 = arith.constant 0 : index
    %0 = vector.load %arg1[%c0, %c0_0] : memref<16x1xi32, #tpu.memory_space<vmem>>, vector<16x1xi32>
    %1 = tpu.iota {dimensions = array<i32: 1>} : vector<16x64xi32>
    %2 = vector.broadcast %0 : vector<16x1xi32> to vector<16x64xi32>
    %3 = arith.cmpi eq, %1, %2 : vector<16x64xi32>
    %4 = arith.extui %3 : vector<16x64xi1> to vector<16x64xi32>
    %5 = arith.sitofp %4 : vector<16x64xi32> to vector<16x64xf32>
    %c0_1 = arith.constant 0 : index
    %c0_2 = arith.constant 0 : index
    %6 = vector.load %arg2[%c0_1, %c0_2] : memref<64x128xf32, #tpu.memory_space<vmem>>, vector<64x128xf32>
    %cst = arith.constant dense<0.000000e+00> : vector<16x128xf32>
    %7 = tpu.matmul %5, %6, %cst {dimension_numbers = #tpu.dot_dimension_numbers<[1], [0], [0], [1], [0, 0, 1, 1], [], []>} : vector<16x64xf32>, vector<64x128xf32>, vector<16x128xf32> -> vector<16x128xf32>
    %cst_3 = arith.constant 11.3137083 : f32
    %8 = vector.broadcast %cst_3 : f32 to vector<16x128xf32>
    %9 = arith.mulf %7, %8 : vector<16x128xf32>
    %c0_4 = arith.constant 0 : index
    %c0_5 = arith.constant 0 : index
    %10 = vector.load %arg3[%c0_4, %c0_5] : memref<16x128xf32, #tpu.memory_space<vmem>>, vector<16x128xf32>
    tpu.vector_store %arg3[%c0_4, %c0_5], %9 {strides = array<i32>} : memref<16x128xf32, #tpu.memory_space<vmem>>, vector<16x128xf32>,
    return
  }
  func.func @transform_0(%arg0: i32) -> (i32, i32) {
    %c0_i32 = arith.constant 0 : i32
    %c0_i32_0 = arith.constant 0 : i32
    return %arg0, %c0_i32 : i32, i32
  }
  func.func @transform_1(%arg0: i32) -> (i32, i32) {
    %c0_i32 = arith.constant 0 : i32
    %c0_i32_0 = arith.constant 0 : i32
    %c0_i32_1 = arith.constant 0 : i32
    return %c0_i32, %c0_i32_0 : i32, i32
  }
  func.func @transform_2(%arg0: i32) -> (i32, i32) {
    %c0_i32 = arith.constant 0 : i32
    %c0_i32_0 = arith.constant 0 : i32
    return %arg0, %c0_i32 : i32, i32
  }
}

module attributes {stable_mosaic.version = 11 : i64} {
  func.func @_embed_onehot_kernel(%arg0: i32, %arg1: memref<16x1xi32, #tpu.memory_space<vmem>>, %arg2: memref<64x128xf32, #tpu.memory_space<vmem>>, %arg3: memref<16x128xf32, #tpu.memory_space<vmem>>) attributes {dimension_semantics = [#tpu.dimension_semantics<parallel>], iteration_bounds = array<i64: 1>, scalar_prefetch = 0 : i64, scratch_operands = 0 : i64, tpu.core_type = #tpu.core_type<tc>, window_params = [{transform_indices = @transform_0, window_bounds = array<i64: 16, 1>}, {pipeline_mode = #tpu.pipeline_mode<synchronous>, transform_indices = @transform_1, window_bounds = array<i64: 64, 128>}, {transform_indices = @transform_2, window_bounds = array<i64: 16, 128>}]} {
    %c0 = arith.constant 0 : index
    %c0_0 = arith.constant 0 : index
    %0 = vector.load %arg1[%c0, %c0_0] : memref<16x1xi32, #tpu.memory_space<vmem>>, vector<16x1xi32>
    %1 = tpu.iota {dimensions = array<i32: 1>} : vector<16x64xi32>
    %2 = vector.broadcast %0 : vector<16x1xi32> to vector<16x64xi32>
    %3 = arith.cmpi eq, %1, %2 : vector<16x64xi32>
    %4 = arith.extui %3 : vector<16x64xi1> to vector<16x64xi32>
    %5 = arith.sitofp %4 : vector<16x64xi32> to vector<16x64xf32>
    %c0_1 = arith.constant 0 : index
    %c0_2 = arith.constant 0 : index
    %6 = vector.load %arg2[%c0_1, %c0_2] : memref<64x128xf32, #tpu.memory_space<vmem>>, vector<64x128xf32>
    %cst = arith.constant dense<0.000000e+00> : vector<16x128xf32>
    %7 = tpu.matmul %5, %6, %cst {dimension_numbers = #tpu.dot_dimension_numbers<[1], [0], [0], [1], [0, 0, 1, 1], [], []>} : vector<16x64xf32>, vector<64x128xf32>, vector<16x128xf32> -> vector<16x128xf32>
    %cst_3 = arith.constant 11.3137083 : f32
    %8 = vector.broadcast %cst_3 : f32 to vector<16x128xf32>
    %9 = arith.mulf %7, %8 : vector<16x128xf32>
    %c0_4 = arith.constant 0 : index
    %c0_5 = arith.constant 0 : index
    %10 = vector.load %arg3[%c0_4, %c0_5] : memref<16x128xf32, #tpu.memory_space<vmem>>, vector<16x128xf32>
    tpu.vector_store %arg3[%c0_4, %c0_5], %9 {strides = array<i32>} : memref<16x128xf32, #tpu.memory_space<vmem>>, vector<16x128xf32>,
    return
  }
  func.func @transform_0(%arg0: i32) -> (i32, i32) {
    %c0_i32 = arith.constant 0 : i32
    %c0_i32_0 = arith.constant 0 : i32
    return %arg0, %c0_i32 : i32, i32
  }
  func.func @transform_1(%arg0: i32) -> (i32, i32) {
    %c0_i32 = arith.constant 0 : i32
    %c0_i32_0 = arith.constant 0 : i32
    %c0_i32_1 = arith.constant 0 : i32
    return %c0_i32, %c0_i32_0 : i32, i32
  }
  func.func @transform_2(%arg0: i32) -> (i32, i32) {
    %c0_i32 = arith.constant 0 : i32
    %c0_i32_0 = arith.constant 0 : i32
    return %arg0, %c0_i32 : i32, i32
  }
}

</mosaic_0001>

<llo_original>
// kernel: tpu_custom_call.1
$region0: #{tpu_custom_call.1}
  #allocation0 [shape = 'u32[]', space=smem, size = 0x4, offset = 0x4, fixed_abs, tag = 'smem constant byte address 0x4 - core index']
  #allocation1 [shape = 'u32[144,128]{1,0:T(1,128)}', space=vmem, size = 0x12000, scoped, tag = 'internal scratch']
  %s0 = inlined_call_operand.vmem [shape: s32[16,1], index: 0, kind: input, shape index: {}]
  %s1 = inlined_call_operand.hbm [shape: f32[64,128], index: 1, kind: input, shape index: {}]
  %s2 = inlined_call_operand.hbm [shape: f32[16,128], index: 2, kind: output, shape index: {}]
  %s3 = sld [smem:[#allocation0]]
  $region22: #{tpu_custom_call.1} parent=0
    _
  %s5 = ssub.s32 1, %s3
  %s6 = scalar_select 0, %s5, %s3
  $region1: #{tpu_custom_call.1} parent=0
    #allocation2 [shape = 'u8[32768]{0}', space=vmem, size = 0x8000, scoped, tag = 'input window, operand 1, single buffered']
    #allocation3 [shape = 's32[1]{0}', space=sflag, size = 0x4, scoped, tag = 'scoped memory for tpu_custom_call.1']
    #allocation4 [shape = 's32[1]{0}', space=sflag, size = 0x4, scoped, tag = 'scoped memory for tpu_custom_call.1']
    #allocation5 [shape = 'u8[8192]{0}', space=vmem, size = 0x2000, scoped, tag = 'output window, operand 0, single buffered']
    %7 = vsyncpa [#allocation3], 0
    %8 = vsyncpa [#allocation4], 0
    // Predicated region
    $region2: #{tpu_custom_call.1} parent=1 // pred_check
      _
    $region3: #{tpu_custom_call.1} parent=1 // pred_check_branch
      %10 = sbr.rel (0) target = $region5
    $region4: #{tpu_custom_call.1} parent=1 // pred_region
      _
    $region5: #{tpu_custom_call.1} parent=1 // pred_fallthru
      _
    // Predicated region
    $region6: #{tpu_custom_call.1} parent=1 // pred_check
      _
    $region7: #{tpu_custom_call.1} parent=1 // pred_check_branch
      %12 = sbr.rel (0) target = $region9
    $region8: #{tpu_custom_call.1} parent=1 // pred_region
      %s14 = ssub.s32 1024, 1024
      %15 = vsyncadd [#allocation3], %s14
      %s16 = sshll.u32 [#allocation2], 4
      %s17 = int_to_ptr.vmem [resolvable:$true] %s16
      %22 = dma.hbm_to_vmem [thread:$0]  %s1, 1024, %s17, [#allocation3], 128, 128, 8
    $region9: #{tpu_custom_call.1} parent=1 // pred_fallthru
      _
    // Predicated region
    $region10: #{tpu_custom_call.1} parent=1 // pred_check
      _
    $region11: #{tpu_custom_call.1} parent=1 // pred_check_branch
      %24 = sbr.rel (0) target = $region13
    $region12: #{tpu_custom_call.1} parent=1 // pred_region
      %25 = dma.done [#allocation3], 1024
    $region13: #{tpu_custom_call.1} parent=1 // pred_fallthru
      _
    %v26 = vld [vmem:[%s0] sm:$0xff]
    %v27 = vld [vmem:[%s0 + $0x8] sm:$0xff]
    %v28 = vlaneseq
    %v29 = vand.u32 %v28, 127
    %30 = vset.pattern.permute.xlu0 0
    %31 = vperm.xlu0 %30, %v26
    %v32 = vpop.permute.xlu0 %31
    %33 = vset.pattern.permute.xlu0 0
    %34 = vperm.xlu0 %33, %v27
    %v35 = vpop.permute.xlu0 %34
    %vm36 = vcmp.eq.s32.totalorder %v29, %v32
    %vm37 = vcmp.eq.s32.totalorder %v29, %v35
    %v38 = vsel %vm36, 1, 0
    %v39 = vsel %vm37, 1, 0
    %v40 = vcvt.s32.f32 %v38
    %v41 = vcvt.s32.f32 %v39
    %v42 = vld [vmem:[#allocation2] sm:$0xff]
    %v43 = vld [vmem:[#allocation2 + $0x8] sm:$0xff]
    %v44 = vld [vmem:[#allocation2 + $0x10] sm:$0xff]
    %v45 = vld [vmem:[#allocation2 + $0x18] sm:$0xff]
    %v46 = vld [vmem:[#allocation2 + $0x20] sm:$0xff]
    %v47 = vld [vmem:[#allocation2 + $0x28] sm:$0xff]
    %v48 = vld [vmem:[#allocation2 + $0x30] sm:$0xff]
    %v49 = vld [vmem:[#allocation2 + $0x38] sm:$0xff]
    %vm50 = vcmask 523264
    %v52 = vsel %vm50, %v40, 0
    %v55 = vsel %vm50, %v41, 0
    %57 = vmatprep.subr.mxu0 0.0
    %58 = vmatpush1.msra.mxu0 %v42
    %59 = vmatprep.subr.mxu0 0.0
    %60 = vmatpush1.msra.mxu0 %v43
    %61 = vmatprep.subr.mxu0 0.0
    %62 = vmatpush1.msra.mxu0 %v44
    %63 = vmatprep.subr.mxu0 0.0
    %64 = vmatpush1.msra.mxu0 %v45
    %65 = vmatprep.subr.mxu0 0.0
    %66 = vmatpush1.msra.mxu0 %v46
    %67 = vmatprep.subr.mxu0 0.0
    %68 = vmatpush1.msra.mxu0 %v47
    %69 = vmatprep.subr.mxu0 0.0
    %70 = vmatpush1.msra.mxu0 %v48
    %71 = vmatprep.subr.mxu0 0.0
    %72 = vmatpush1.msra.mxu0 %v49
    %73 = vmatprep.subr.mxu0 0.0
    %74 = vmatpush1.msra.mxu0 0.0
    %75 = vmatprep.subr.mxu0 0.0
    %76 = vmatpush1.msra.mxu0 0.0
    %77 = vmatprep.subr.mxu0 0.0
    %78 = vmatpush1.msra.mxu0 0.0
    %79 = vmatprep.subr.mxu0 0.0
    %80 = vmatpush1.msra.mxu0 0.0
    %81 = vmatprep.subr.mxu0 0.0
    %82 = vmatpush1.msra.mxu0 0.0
    %83 = vmatprep.subr.mxu0 0.0
    %84 = vmatpush1.msra.mxu0 0.0
    %85 = vmatprep.subr.mxu0 0.0
    %86 = vmatpush1.msra.mxu0 0.0
    %87 = vmatprep.subr.mxu0 0.0
    %88 = vmatpush1.msra.mxu0 0.0
    %89 = vmatprep.subr.mxu0 0.0
    %90 = vmatpush1.msra.mxu0 0.0
    %91 = vmatprep.subr.mxu0 0.0
    %92 = vmatpush1.msra.mxu0 0.0
    %93 = vmatprep.subr.mxu0 0.0
    %94 = vmatpush1.msra.mxu0 0.0
    %95 = vmatprep.subr.mxu0 0.0
    %96 = vmatpush1.msra.mxu0 0.0
    %97 = vmatprep.subr.mxu0 0.0
    %98 = vmatpush1.msra.mxu0 0.0
    %99 = vmatprep.subr.mxu0 0.0
    %100 = vmatpush1.msra.mxu0 0.0
    %101 = vmatprep.subr.mxu0 0.0
    %102 = vmatpush1.msra.mxu0 0.0
    %103 = vmatprep.subr.mxu0 0.0
    %104 = vmatpush1.msra.mxu0 0.0
    %105 = vmatprep.subr.mxu0 0.0
    %106 = vmatpush1.msra.mxu0 0.0
    %107 = vmatprep.subr.mxu0 0.0
    %108 = vmatpush1.msra.mxu0 0.0
    %109 = vmatprep.subr.mxu0 0.0
    %110 = vmatpush1.msra.mxu0 0.0
    %111 = vmatprep.subr.mxu0 0.0
    %112 = vmatpush1.msra.mxu0 0.0
    %113 = vmatprep.subr.mxu0 0.0
    %114 = vmatpush1.msra.mxu0 0.0
    %115 = vmatprep.subr.mxu0 0.0
    %116 = vmatpush1.msra.mxu0 0.0
    %117 = vmatprep.subr.mxu0 0.0
    %118 = vmatpush1.msra.mxu0 0.0
    %119 = vmatprep.subr.mxu0 0.0
    %120 = vmatpush1.msra.mxu0 0.0
    %121 = vmatprep.mubr.f32.mxu0 0.0
    %122 = vmatmul.mubr.f32.gmra.mrb[0].mxu0 %v52
    %v123 = vpop.f32.mrb[0].mxu0
    %v124 = vadd.f32 0.0, %v123
    %v125 = vpop.f32.mrb[0].mxu0
    %126 = vmatprep.mubr.f32.mxu0 0.0
    %127 = vmatmul.mubr.f32.gmra.mrb[0].mxu0 %v55
    %v128 = vpop.f32.mrb[0].mxu0
    %v129 = vadd.f32 0.0, %v128
    %v130 = vpop.f32.mrb[0].mxu0
    %131 = vdwg.mxu0
    %v132 = vmul.f32 %v124, 11.313708
    %v133 = vmul.f32 %v129, 11.313708
    %134 = vst [vmem:[#allocation5] sm:$0xff] %v132
    %135 = vst [vmem:[#allocation5 + $0x8] sm:$0xff] %v133
    // Predicated region
    $region14: #{tpu_custom_call.1} parent=1 // pred_check
      _
    $region15: #{tpu_custom_call.1} parent=1 // pred_check_branch
      %137 = sbr.rel (0) target = $region17
    $region16: #{tpu_custom_call.1} parent=1 // pred_region
      %s139 = ssub.s32 256, 256
      %140 = vsyncadd [#allocation4], %s139
      %s141 = sshll.u32 [#allocation5], 4
      %s142 = int_to_ptr.vmem [resolvable:$true] %s141
      %147 = dma.vmem_to_hbm [thread:$0]  %s142, 256, %s2, [#allocation4], 128, 128, 8
    $region17: #{tpu_custom_call.1} parent=1 // pred_fallthru
      _
    // Predicated region
    $region18: #{tpu_custom_call.1} parent=1 // pred_check
      _
    $region19: #{tpu_custom_call.1} parent=1 // pred_check_branch
      %149 = sbr.rel (0) target = $region21
    $region20: #{tpu_custom_call.1} parent=1 // pred_region
      %150 = dma.done [#allocation4], 256
    $region21: #{tpu_custom_call.1} parent=1 // pred_fallthru
      _
    %151 = vsyncpa [#allocation3], 1
    %152 = vsyncpa [#allocation4], 1

// kernel: tpu_custom_call.1
$region0: #{tpu_custom_call.1}
  #allocation0 [shape = 'u32[]', space=smem, size = 0x4, offset = 0x4, fixed_abs, tag = 'smem constant byte address 0x4 - core index']
  #allocation1 [shape = 'u32[144,128]{1,0:T(1,128)}', space=vmem, size = 0x12000, scoped, tag = 'internal scratch']
  %s0 = inlined_call_operand.vmem [shape: s32[16,1], index: 0, kind: input, shape index: {}]
  %s1 = inlined_call_operand.hbm [shape: f32[64,128], index: 1, kind: input, shape index: {}]
  %s2 = inlined_call_operand.hbm [shape: f32[16,128], index: 2, kind: output, shape index: {}]
  %s3 = sld [smem:[#allocation0]]
  $region22: #{tpu_custom_call.1} parent=0
    _
  %s5 = ssub.s32 1, %s3
  %s6 = scalar_select 0, %s5, %s3
  $region1: #{tpu_custom_call.1} parent=0
    #allocation2 [shape = 'u8[32768]{0}', space=vmem, size = 0x8000, scoped, tag = 'input window, operand 1, single buffered']
    #allocation3 [shape = 's32[1]{0}', space=sflag, size = 0x4, scoped, tag = 'scoped memory for tpu_custom_call.1']
    #allocation4 [shape = 's32[1]{0}', space=sflag, size = 0x4, scoped, tag = 'scoped memory for tpu_custom_call.1']
    #allocation5 [shape = 'u8[8192]{0}', space=vmem, size = 0x2000, scoped, tag = 'output window, operand 0, single buffered']
    %7 = vsyncpa [#allocation3], 0
    %8 = vsyncpa [#allocation4], 0
    // Predicated region
    $region2: #{tpu_custom_call.1} parent=1 // pred_check
      _
    $region3: #{tpu_custom_call.1} parent=1 // pred_check_branch
      %10 = sbr.rel (0) target = $region5
    $region4: #{tpu_custom_call.1} parent=1 // pred_region
      _
    $region5: #{tpu_custom_call.1} parent=1 // pred_fallthru
      _
    // Predicated region
    $region6: #{tpu_custom_call.1} parent=1 // pred_check
      _
    $region7: #{tpu_custom_call.1} parent=1 // pred_check_branch
      %12 = sbr.rel (0) target = $region9
    $region8: #{tpu_custom_call.1} parent=1 // pred_region
      %s14 = ssub.s32 1024, 1024
      %15 = vsyncadd [#allocation3], %s14
      %s16 = sshll.u32 [#allocation2], 4
      %s17 = int_to_ptr.vmem [resolvable:$true] %s16
      %22 = dma.hbm_to_vmem [thread:$0]  %s1, 1024, %s17, [#allocation3], 128, 128, 8
    $region9: #{tpu_custom_call.1} parent=1 // pred_fallthru
      _
    // Predicated region
    $region10: #{tpu_custom_call.1} parent=1 // pred_check
      _
    $region11: #{tpu_custom_call.1} parent=1 // pred_check_branch
      %24 = sbr.rel (0) target = $region13
    $region12: #{tpu_custom_call.1} parent=1 // pred_region
      %25 = dma.done [#allocation3], 1024
    $region13: #{tpu_custom_call.1} parent=1 // pred_fallthru
      _
    %v26 = vld [vmem:[%s0] sm:$0xff]
    %v27 = vld [vmem:[%s0 + $0x8] sm:$0xff]
    %v28 = vlaneseq
    %v29 = vand.u32 %v28, 127
    %30 = vset.pattern.permute.xlu0 0
    %31 = vperm.xlu0 %30, %v26
    %v32 = vpop.permute.xlu0 %31
    %33 = vset.pattern.permute.xlu0 0
    %34 = vperm.xlu0 %33, %v27
    %v35 = vpop.permute.xlu0 %34
    %vm36 = vcmp.eq.s32.totalorder %v29, %v32
    %vm37 = vcmp.eq.s32.totalorder %v29, %v35
    %v38 = vsel %vm36, 1, 0
    %v39 = vsel %vm37, 1, 0
    %v40 = vcvt.s32.f32 %v38
    %v41 = vcvt.s32.f32 %v39
    %v42 = vld [vmem:[#allocation2] sm:$0xff]
    %v43 = vld [vmem:[#allocation2 + $0x8] sm:$0xff]
    %v44 = vld [vmem:[#allocation2 + $0x10] sm:$0xff]
    %v45 = vld [vmem:[#allocation2 + $0x18] sm:$0xff]
    %v46 = vld [vmem:[#allocation2 + $0x20] sm:$0xff]
    %v47 = vld [vmem:[#allocation2 + $0x28] sm:$0xff]
    %v48 = vld [vmem:[#allocation2 + $0x30] sm:$0xff]
    %v49 = vld [vmem:[#allocation2 + $0x38] sm:$0xff]
    %vm50 = vcmask 523264
    %v52 = vsel %vm50, %v40, 0
    %v55 = vsel %vm50, %v41, 0
    %57 = vmatprep.subr.mxu0 0.0
    %58 = vmatpush1.msra.mxu0 %v42
    %59 = vmatprep.subr.mxu0 0.0
    %60 = vmatpush1.msra.mxu0 %v43
    %61 = vmatprep.subr.mxu0 0.0
    %62 = vmatpush1.msra.mxu0 %v44
    %63 = vmatprep.subr.mxu0 0.0
    %64 = vmatpush1.msra.mxu0 %v45
    %65 = vmatprep.subr.mxu0 0.0
    %66 = vmatpush1.msra.mxu0 %v46
    %67 = vmatprep.subr.mxu0 0.0
    %68 = vmatpush1.msra.mxu0 %v47
    %69 = vmatprep.subr.mxu0 0.0
    %70 = vmatpush1.msra.mxu0 %v48
    %71 = vmatprep.subr.mxu0 0.0
    %72 = vmatpush1.msra.mxu0 %v49
    %73 = vmatprep.subr.mxu0 0.0
    %74 = vmatpush1.msra.mxu0 0.0
    %75 = vmatprep.subr.mxu0 0.0
    %76 = vmatpush1.msra.mxu0 0.0
    %77 = vmatprep.subr.mxu0 0.0
    %78 = vmatpush1.msra.mxu0 0.0
    %79 = vmatprep.subr.mxu0 0.0
    %80 = vmatpush1.msra.mxu0 0.0
    %81 = vmatprep.subr.mxu0 0.0
    %82 = vmatpush1.msra.mxu0 0.0
    %83 = vmatprep.subr.mxu0 0.0
    %84 = vmatpush1.msra.mxu0 0.0
    %85 = vmatprep.subr.mxu0 0.0
    %86 = vmatpush1.msra.mxu0 0.0
    %87 = vmatprep.subr.mxu0 0.0
    %88 = vmatpush1.msra.mxu0 0.0
    %89 = vmatprep.subr.mxu0 0.0
    %90 = vmatpush1.msra.mxu0 0.0
    %91 = vmatprep.subr.mxu0 0.0
    %92 = vmatpush1.msra.mxu0 0.0
    %93 = vmatprep.subr.mxu0 0.0
    %94 = vmatpush1.msra.mxu0 0.0
    %95 = vmatprep.subr.mxu0 0.0
    %96 = vmatpush1.msra.mxu0 0.0
    %97 = vmatprep.subr.mxu0 0.0
    %98 = vmatpush1.msra.mxu0 0.0
    %99 = vmatprep.subr.mxu0 0.0
    %100 = vmatpush1.msra.mxu0 0.0
    %101 = vmatprep.subr.mxu0 0.0
    %102 = vmatpush1.msra.mxu0 0.0
    %103 = vmatprep.subr.mxu0 0.0
    %104 = vmatpush1.msra.mxu0 0.0
    %105 = vmatprep.subr.mxu0 0.0
    %106 = vmatpush1.msra.mxu0 0.0
    %107 = vmatprep.subr.mxu0 0.0
    %108 = vmatpush1.msra.mxu0 0.0
    %109 = vmatprep.subr.mxu0 0.0
    %110 = vmatpush1.msra.mxu0 0.0
    %111 = vmatprep.subr.mxu0 0.0
    %112 = vmatpush1.msra.mxu0 0.0
    %113 = vmatprep.subr.mxu0 0.0
    %114 = vmatpush1.msra.mxu0 0.0
    %115 = vmatprep.subr.mxu0 0.0
    %116 = vmatpush1.msra.mxu0 0.0
    %117 = vmatprep.subr.mxu0 0.0
    %118 = vmatpush1.msra.mxu0 0.0
    %119 = vmatprep.subr.mxu0 0.0
    %120 = vmatpush1.msra.mxu0 0.0
    %121 = vmatprep.mubr.f32.mxu0 0.0
    %122 = vmatmul.mubr.f32.gmra.mrb[0].mxu0 %v52
    %v123 = vpop.f32.mrb[0].mxu0
    %v124 = vadd.f32 0.0, %v123
    %v125 = vpop.f32.mrb[0].mxu0
    %126 = vmatprep.mubr.f32.mxu0 0.0
    %127 = vmatmul.mubr.f32.gmra.mrb[0].mxu0 %v55
    %v128 = vpop.f32.mrb[0].mxu0
    %v129 = vadd.f32 0.0, %v128
    %v130 = vpop.f32.mrb[0].mxu0
    %131 = vdwg.mxu0
    %v132 = vmul.f32 %v124, 11.313708
    %v133 = vmul.f32 %v129, 11.313708
    %134 = vst [vmem:[#allocation5] sm:$0xff] %v132
    %135 = vst [vmem:[#allocation5 + $0x8] sm:$0xff] %v133
    // Predicated region
    $region14: #{tpu_custom_call.1} parent=1 // pred_check
      _
    $region15: #{tpu_custom_call.1} parent=1 // pred_check_branch
      %137 = sbr.rel (0) target = $region17
    $region16: #{tpu_custom_call.1} parent=1 // pred_region
      %s139 = ssub.s32 256, 256
      %140 = vsyncadd [#allocation4], %s139
      %s141 = sshll.u32 [#allocation5], 4
      %s142 = int_to_ptr.vmem [resolvable:$true] %s141
      %147 = dma.vmem_to_hbm [thread:$0]  %s142, 256, %s2, [#allocation4], 128, 128, 8
    $region17: #{tpu_custom_call.1} parent=1 // pred_fallthru
      _
    // Predicated region
    $region18: #{tpu_custom_call.1} parent=1 // pred_check
      _
    $region19: #{tpu_custom_call.1} parent=1 // pred_check_branch
      %149 = sbr.rel (0) target = $region21
    $region20: #{tpu_custom_call.1} parent=1 // pred_region
      %150 = dma.done [#allocation4], 256
    $region21: #{tpu_custom_call.1} parent=1 // pred_fallthru
      _
    %151 = vsyncpa [#allocation3], 1
    %152 = vsyncpa [#allocation4], 1

</llo_original>
